<compile_context>
chip_gen: v7x
topology: tpu7x:2x2x1
jax: 0.10.0
libtpu: 0.0.40
codegen_flags: <defaults>
</compile_context>

<pallas_src>
import jax
import jax.numpy as jnp
from jax.experimental import pallas as pl
from jax.experimental.pallas import tpu as pltpu


def _round_up(x: int, m: int) -> int:
    return ((x + m - 1) // m) * m


def edge_mlp_kernel(idx_ref, tbl_ref, w1T_ref, bw_ref, b2_ref, o_ref):
    # idx: (4, TB) int32  — rows already offset into the combined vocab:
    #      [part_i, Vp+fam_i, Vp+Vf+part_j, 2Vp+Vf+fam_j]
    # tbl: (4E, Vtot) f32 — block-diagonal stacked embedding tables (VMEM-resident)
    # w1T: (H, 4E)   f32  — fc1 weight, transposed (VMEM-resident)
    # bw:  (H, 2)    f32  — column 0 = b1, column 1 = w2 (packed)
    # b2:  (1,)      f32  — scalar bias in SMEM
    # o:   (1, TB)   f32  — lane-dense output block
    idx = idx_ref[...]                                   # (4, TB)
    vtot = tbl_ref.shape[1]
    tb = idx.shape[1]

    # Multi-hot gather matrix: 4 ones per column, in 4 disjoint vocab ranges.
    vio = jax.lax.broadcasted_iota(jnp.int32, (vtot, tb), 0)
    hit = (vio == idx[0:1, :]) | (vio == idx[1:2, :]) \
        | (vio == idx[2:3, :]) | (vio == idx[3:4, :])
    mh = hit.astype(jnp.float32)                         # (Vtot, TB)

    # Exact gather + concat on the MXU: xT = T @ multihot  -> (4E, TB)
    xT = jnp.dot(tbl_ref[...], mh, preferred_element_type=jnp.float32)

    # fc1: single K=4E MXU pass, batch on lanes -> (H, TB)
    hT = jnp.dot(w1T_ref[...], xT, preferred_element_type=jnp.float32)
    hT = jnp.maximum(hT + bw_ref[:, 0:1], 0.0)           # +b1, ReLU (VPU, f32)

    # fc2 (H -> 1): VPU multiply + sublane reduce (XLU), + scalar b2 from SMEM.
    y = jnp.sum(hT * bw_ref[:, 1:2], axis=0, keepdims=True) + b2_ref[0]   # (1, TB)
    o_ref[...] = y.astype(o_ref.dtype)


def edge_prediction_forward(part_i, fam_i, part_j, fam_j, params):
    """Fully fused forward: gather + concat + MLP inside one Pallas kernel."""
    part_emb = params["part_embedding"]   # (Vp, E)
    fam_emb = params["family_embedding"]  # (Vf, E)
    w1, b1 = params["w1"], params["b1"]   # (4E, H), (H,)
    w2, b2 = params["w2"], params["b2"]   # (H, 1), (1,)

    Vp, E = part_emb.shape
    Vf = fam_emb.shape[0]
    F = 4 * E
    H = w1.shape[1]
    B = part_i.shape[0]

    # Block-diagonal combined table (4E, Vtot_pad); zero padding columns are inert.
    Vtot = 2 * Vp + 2 * Vf
    Vtot_pad = _round_up(Vtot, 8)
    tbl = jnp.zeros((F, Vtot_pad), jnp.float32)
    tbl = tbl.at[0:E, 0:Vp].set(part_emb.T)
    tbl = tbl.at[E:2 * E, Vp:Vp + Vf].set(fam_emb.T)
    tbl = tbl.at[2 * E:3 * E, Vp + Vf:2 * Vp + Vf].set(part_emb.T)
    tbl = tbl.at[3 * E:4 * E, 2 * Vp + Vf:Vtot].set(fam_emb.T)

    # Offset + stack indices: (4, B) int32 — the only per-row HBM input stream.
    idx = jnp.stack(
        [part_i.astype(jnp.int32),
         fam_i.astype(jnp.int32) + Vp,
         part_j.astype(jnp.int32) + (Vp + Vf),
         fam_j.astype(jnp.int32) + (2 * Vp + Vf)], axis=0)

    # Packed small params: [b1 | w2] as one (H, 2) operand; b2 goes to SMEM.
    bw = jnp.concatenate([b1.reshape(H, 1), w2.reshape(H, 1)], axis=1)

    # Batch tiling: lane-dense tiles up to 2048 lanes (amortizes ~0.35us/step
    # overhead; intermediates at TB=2048 are <2 MiB, far under any VMEM limit),
    # clamped so the grid keeps >=2 (typically ~4) tiles for v7x megacore.
    B_128 = _round_up(B, 128)
    TB = min(2048, max(128, _round_up(max(B_128 // 4, 1), 128)))
    B_pad = _round_up(B, TB)
    if B_pad != B:
        idx = jnp.pad(idx, ((0, 0), (0, B_pad - B)))   # pad index 0: garbage lanes sliced off
    num_tiles = B_pad // TB

    cost = pl.CostEstimate(
        flops=2 * B_pad * Vtot_pad * F + 2 * B_pad * F * H + 4 * B_pad * H,
        transcendentals=0,
        bytes_accessed=4 * (4 * B_pad + F * Vtot_pad + H * F + 2 * H + 1 + B_pad),
    )

    out = pl.pallas_call(
        edge_mlp_kernel,
        out_shape=jax.ShapeDtypeStruct((1, B_pad), jnp.float32),
        grid=(num_tiles,),
        in_specs=[
            pl.BlockSpec((4, TB), lambda i: (0, i)),            # indices: pipelined over batch
            pl.BlockSpec((F, Vtot_pad), lambda i: (0, 0)),      # combined emb table: VMEM-resident
            pl.BlockSpec((H, F), lambda i: (0, 0)),             # W1^T: VMEM-resident
            pl.BlockSpec((H, 2), lambda i: (0, 0)),             # [b1 | w2] packed
            pl.BlockSpec(memory_space=pltpu.MemorySpace.SMEM),  # b2 scalar in SMEM
        ],
        out_specs=pl.BlockSpec((1, TB), lambda i: (0, i)),      # lane-dense output
        compiler_params=pltpu.CompilerParams(
            dimension_semantics=("parallel",),
        ),
        cost_estimate=cost,
    )(idx, tbl, w1.T, bw, b2.astype(jnp.float32))

    return out[0, :B]                     # drop pad lanes; matches .squeeze(1)


def init_params(key, part_vocab_size, family_vocab_size, embed_dim=16, hidden_dim=32):
    """Deterministic parameter init mirroring the PyTorch module's shapes."""
    k = jax.random.split(key, 6)
    in1 = embed_dim * 4
    lim1 = 1.0 / jnp.sqrt(in1)
    lim2 = 1.0 / jnp.sqrt(hidden_dim)
    return {
        # nn.Embedding default init: N(0, 1)
        "part_embedding": jax.random.normal(k[0], (part_vocab_size, embed_dim), jnp.float32),
        "family_embedding": jax.random.normal(k[1], (family_vocab_size, embed_dim), jnp.float32),
        # nn.Linear default init: U(-1/sqrt(fan_in), 1/sqrt(fan_in)); stored as (in, out)
        "w1": jax.random.uniform(k[2], (in1, hidden_dim), jnp.float32, -lim1, lim1),
        "b1": jax.random.uniform(k[3], (hidden_dim,), jnp.float32, -lim1, lim1),
        "w2": jax.random.uniform(k[4], (hidden_dim, 1), jnp.float32, -lim2, lim2),
        "b2": jax.random.uniform(k[5], (1,), jnp.float32, -lim2, lim2),
    }


def reference_forward(part_i, fam_i, part_j, fam_j, params):
    """Pure-JAX reference of the same forward pass (sanity check)."""
    x = jnp.concatenate(
        [params["part_embedding"][part_i], params["family_embedding"][fam_i],
         params["part_embedding"][part_j], params["family_embedding"][fam_j]], axis=1)
    h = jnp.maximum(x @ params["w1"] + params["b1"], 0.0)
    return (h @ params["w2"] + params["b2"])[:, 0]


if __name__ == "__main__":
    key = jax.random.PRNGKey(0)
    part_vocab_size, family_vocab_size = 20, 10
    embed_dim, hidden_dim = 16, 32
    batch = 200   # exercises batch padding and the 2-tile grid path

    params = init_params(key, part_vocab_size, family_vocab_size, embed_dim, hidden_dim)

    k_pi, k_fi, k_pj, k_fj = jax.random.split(jax.random.PRNGKey(1), 4)
    part_i = jax.random.randint(k_pi, (batch,), 0, part_vocab_size)
    fam_i = jax.random.randint(k_fi, (batch,), 0, family_vocab_size)
    part_j = jax.random.randint(k_pj, (batch,), 0, part_vocab_size)
    fam_j = jax.random.randint(k_fj, (batch,), 0, family_vocab_size)

    out = edge_prediction_forward(part_i, fam_i, part_j, fam_j, params)
    out = jax.block_until_ready(out)

    ref = reference_forward(part_i, fam_i, part_j, fam_j, params)
    assert out.shape == (batch,)
    assert jnp.allclose(out, ref, atol=1e-3, rtol=1e-3), float(jnp.max(jnp.abs(out - ref)))

    print("KERNEL_OK")
</pallas_src>

<mosaic_0001>
module attributes {stable_mosaic.version = 11 : i64} {
  func.func @edge_mlp_kernel(%arg0: i32, %arg1: memref<4x128xi32, #tpu.memory_space<vmem>>, %arg2: memref<64x64xf32, #tpu.memory_space<vmem>>, %arg3: memref<32x64xf32, #tpu.memory_space<vmem>>, %arg4: memref<32x2xf32, #tpu.memory_space<vmem>>, %arg5: memref<1xf32, #tpu.memory_space<smem>>, %arg6: memref<1x128xf32, #tpu.memory_space<vmem>>) attributes {dimension_semantics = [#tpu.dimension_semantics<parallel>], iteration_bounds = array<i64: 2>, scalar_prefetch = 0 : i64, scratch_operands = 0 : i64, tpu.core_type = #tpu.core_type<tc>, window_params = [{transform_indices = @transform_0, window_bounds = array<i64: 4, 128>}, {pipeline_mode = #tpu.pipeline_mode<synchronous>, transform_indices = @transform_1, window_bounds = array<i64: 64, 64>}, {pipeline_mode = #tpu.pipeline_mode<synchronous>, transform_indices = @transform_2, window_bounds = array<i64: 32, 64>}, {pipeline_mode = #tpu.pipeline_mode<synchronous>, transform_indices = @transform_3, window_bounds = array<i64: 32, 2>}, {transform_indices = @transform_4, window_bounds = array<i64: 1>}, {transform_indices = @transform_5, window_bounds = array<i64: 1, 128>}]} {
    %c0 = arith.constant 0 : index
    %c0_0 = arith.constant 0 : index
    %0 = vector.load %arg1[%c0, %c0_0] : memref<4x128xi32, #tpu.memory_space<vmem>>, vector<4x128xi32>
    %1 = tpu.iota {dimensions = array<i32: 0>} : vector<64x128xi32>
    %2 = vector.extract_strided_slice %0 {offsets = [0, 0], sizes = [1, 128], strides = [1, 1]} : vector<4x128xi32> to vector<1x128xi32>
    %3 = vector.broadcast %2 : vector<1x128xi32> to vector<64x128xi32>
    %4 = arith.cmpi eq, %1, %3 : vector<64x128xi32>
    %5 = vector.extract_strided_slice %0 {offsets = [1, 0], sizes = [1, 128], strides = [1, 1]} : vector<4x128xi32> to vector<1x128xi32>
    %6 = vector.broadcast %5 : vector<1x128xi32> to vector<64x128xi32>
    %7 = arith.cmpi eq, %1, %6 : vector<64x128xi32>
    %8 = arith.ori %4, %7 : vector<64x128xi1>
    %9 = vector.extract_strided_slice %0 {offsets = [2, 0], sizes = [1, 128], strides = [1, 1]} : vector<4x128xi32> to vector<1x128xi32>
    %10 = vector.broadcast %9 : vector<1x128xi32> to vector<64x128xi32>
    %11 = arith.cmpi eq, %1, %10 : vector<64x128xi32>
    %12 = arith.ori %8, %11 : vector<64x128xi1>
    %13 = vector.extract_strided_slice %0 {offsets = [3, 0], sizes = [1, 128], strides = [1, 1]} : vector<4x128xi32> to vector<1x128xi32>
    %14 = vector.broadcast %13 : vector<1x128xi32> to vector<64x128xi32>
    %15 = arith.cmpi eq, %1, %14 : vector<64x128xi32>
    %16 = arith.ori %12, %15 : vector<64x128xi1>
    %17 = arith.extui %16 : vector<64x128xi1> to vector<64x128xi32>
    %18 = arith.sitofp %17 : vector<64x128xi32> to vector<64x128xf32>
    %c0_1 = arith.constant 0 : index
    %c0_2 = arith.constant 0 : index
    %19 = vector.load %arg2[%c0_1, %c0_2] : memref<64x64xf32, #tpu.memory_space<vmem>>, vector<64x64xf32>
    %cst = arith.constant dense<0.000000e+00> : vector<64x128xf32>
    %20 = tpu.matmul %19, %18, %cst {dimension_numbers = #tpu.dot_dimension_numbers<[1], [0], [0], [1], [0, 0, 1, 1], [], []>} : vector<64x64xf32>, vector<64x128xf32>, vector<64x128xf32> -> vector<64x128xf32>
    %c0_3 = arith.constant 0 : index
    %c0_4 = arith.constant 0 : index
    %21 = vector.load %arg3[%c0_3, %c0_4] : memref<32x64xf32, #tpu.memory_space<vmem>>, vector<32x64xf32>
    %cst_5 = arith.constant dense<0.000000e+00> : vector<32x128xf32>
    %22 = tpu.matmul %21, %20, %cst_5 {dimension_numbers = #tpu.dot_dimension_numbers<[1], [0], [0], [1], [0, 0, 1, 1], [], []>} : vector<32x64xf32>, vector<64x128xf32>, vector<32x128xf32> -> vector<32x128xf32>
    %c0_6 = arith.constant 0 : index
    %c0_7 = arith.constant 0 : index
    %23 = vector.load %arg4[%c0_6, %c0_7] : memref<32x2xf32, #tpu.memory_space<vmem>>, vector<32x1xf32>
    %24 = vector.broadcast %23 : vector<32x1xf32> to vector<32x128xf32>
    %25 = arith.addf %22, %24 : vector<32x128xf32>
    %cst_8 = arith.constant 0.000000e+00 : f32
    %26 = vector.broadcast %cst_8 : f32 to vector<32x128xf32>
    %27 = arith.maximumf %25, %26 : vector<32x128xf32>
    %c0_9 = arith.constant 0 : index
    %c1 = arith.constant 1 : index
    %28 = vector.load %arg4[%c0_9, %c1] : memref<32x2xf32, #tpu.memory_space<vmem>>, vector<32x1xf32>
    %29 = vector.broadcast %28 : vector<32x1xf32> to vector<32x128xf32>
    %30 = arith.mulf %27, %29 : vector<32x128xf32>
    %cst_10 = arith.constant dense<0.000000e+00> : vector<128xf32>
    %31 = vector.multi_reduction <add>, %30, %cst_10 [0] : vector<32x128xf32> to vector<128xf32>
    %32 = vector.shape_cast %31 : vector<128xf32> to vector<1x128xf32>
    %c0_11 = arith.constant 0 : index
    %33 = memref.load %arg5[%c0_11] : memref<1xf32, #tpu.memory_space<smem>>
    %34 = vector.broadcast %33 : f32 to vector<1x128xf32>
    %35 = arith.addf %32, %34 : vector<1x128xf32>
    %c0_12 = arith.constant 0 : index
    %c0_13 = arith.constant 0 : index
    %36 = vector.load %arg6[%c0_12, %c0_13] : memref<1x128xf32, #tpu.memory_space<vmem>>, vector<1x128xf32>
    tpu.vector_store %arg6[%c0_12, %c0_13], %35 {strides = array<i32>} : memref<1x128xf32, #tpu.memory_space<vmem>>, vector<1x128xf32>,
    return
  }
  func.func @transform_0(%arg0: i32) -> (i32, i32) {
    %c0_i32 = arith.constant 0 : i32
    %c0_i32_0 = arith.constant 0 : i32
    return %c0_i32, %arg0 : i32, i32
  }
  func.func @transform_1(%arg0: i32) -> (i32, i32) {
    %c0_i32 = arith.constant 0 : i32
    %c0_i32_0 = arith.constant 0 : i32
    %c0_i32_1 = arith.constant 0 : i32
    return %c0_i32, %c0_i32_0 : i32, i32
  }
  func.func @transform_2(%arg0: i32) -> (i32, i32) {
    %c0_i32 = arith.constant 0 : i32
    %c0_i32_0 = arith.constant 0 : i32
    %c0_i32_1 = arith.constant 0 : i32
    return %c0_i32, %c0_i32_0 : i32, i32
  }
  func.func @transform_3(%arg0: i32) -> (i32, i32) {
    %c0_i32 = arith.constant 0 : i32
    %c0_i32_0 = arith.constant 0 : i32
    %c0_i32_1 = arith.constant 0 : i32
    return %c0_i32, %c0_i32_0 : i32, i32
  }
  func.func @transform_4(%arg0: i32) -> i32 {
    %c0_i32 = arith.constant 0 : i32
    %c0_i32_0 = arith.constant 0 : i32
    return %c0_i32 : i32
  }
  func.func @transform_5(%arg0: i32) -> (i32, i32) {
    %c0_i32 = arith.constant 0 : i32
    %c0_i32_0 = arith.constant 0 : i32
    return %c0_i32, %arg0 : i32, i32
  }
}

</mosaic_0001>

<llo_original>
// kernel: tpu_custom_call.1
$region0: #{tpu_custom_call.1}
  #allocation0 [shape = 'u32[]', space=smem, size = 0x4, offset = 0x4, fixed_abs, tag = 'smem constant byte address 0x4 - core index']
  #allocation1 [shape = 'u32[144,128]{1,0:T(1,128)}', space=vmem, size = 0x12000, scoped, tag = 'internal scratch']
  #allocation2 [shape = 'f32[1]{0:T(128)S(6)}', space=smem, size = 0x200, scoped, tag = 'scoped memory for tpu_custom_call.1']
  %s0 = inlined_call_operand.vmem [shape: s32[4,256], index: 0, kind: input, shape index: {}]
  %s1 = inlined_call_operand.hbm [shape: f32[64,64], index: 1, kind: input, shape index: {}]
  %s2 = inlined_call_operand.vmem [shape: f32[32,64], index: 2, kind: input, shape index: {}]
  %s3 = inlined_call_operand.vmem [shape: f32[32,2], index: 3, kind: input, shape index: {}]
  %s4 = inlined_call_operand.<no memory space> [shape: f32[1], index: 4, kind: input, shape index: {}]
  %s5 = inlined_call_operand.hbm [shape: f32[1,256], index: 5, kind: output, shape index: {}]
  %s6 = sld [smem:[#allocation0]]
  $region57: #{tpu_custom_call.1} parent=0
    _
  %s8 = ssub.s32 1, %s6
  %s9 = scalar_select 0, %s8, %s6
  %10 = sst [smem:[#allocation2]] %s4
  $region1: #{tpu_custom_call.1} parent=0
    #allocation3 [shape = 'u8[32768]{0}', space=vmem, size = 0x8000, scoped, tag = 'input window, operand 1, single buffered']
    #allocation4 [shape = 's32[2]{0}', space=sflag, size = 0x8, scoped, tag = 'scoped memory for tpu_custom_call.1']
    #allocation5 [shape = 's32[2]{0}', space=sflag, size = 0x8, scoped, tag = 'scoped memory for tpu_custom_call.1']
    #allocation6 [shape = 'u8[1024]{0}', space=vmem, size = 0x400, scoped, tag = 'output window, operand 0']
    %11 = vsyncpa [#allocation4], 0
    %12 = vsyncpa [#allocation5], 0
    %s13 = scalar_lea.sflag [#allocation5], 1
    %14 = vsyncpa %s13, 0
    loop: start=0, step=1, limit=4
    $region2: #{tpu_custom_call.1} parent=1 // loop_pre_header
      _
    $region3: #{tpu_custom_call.1} parent=1 // loop_header
      %s16 = sphi 0, %s20
      %p17 = scmp.ge.s32.totalorder %s16, 4
      %s26 = sphi 0, %s28
      %s29 = sphi 0, %s26
      %s30 = sphi 0, %s29
      %s46 = sphi 0, %s30
      %s50 = sphi 0, %s50
      %s52 = sphi 0, %s50
      %s53 = sphi 0, %s52
      %s67 = sphi 0, %s53
      %s71 = sphi 0, %s71
      %s73 = sphi 0, %s71
      %s74 = sphi 0, %s73
      %s88 = sphi 0, %s74
      %s92 = sphi 0, %s92
      %s94 = sphi 0, %s92
      %s95 = sphi 0, %s94
      %s109 = sphi 0, %s95
      %s113 = sphi 0, %s113
      %s115 = sphi 0, %s113
      %s116 = sphi 0, %s115
      %s130 = sphi 0, %s116
      %s136 = sphi 0, %s138
      %s139 = sphi 0, %s136
      %s140 = sphi 0, %s139
      %s156 = sphi 0, %s140
    $region4: #{tpu_custom_call.1} parent=1 // loop_header_branch
      %19 = sbr.rel (%p17) target = $region8
    $region5: #{tpu_custom_call.1} parent=1 // loop_body
      %s21 = ssub.s32 %s16, 1
      %s22 = ssub.s32 %s16, 2
      %s23 = sadd.s32 %s16, 1
      %s24 = ssub.s32 %s16, %s23
      %p25 = scmp.eq.s32.totalorder %s24, 0
      %s27 = sadd.s32 %s26, 1
      %s28 = scalar_select %p25, %s26, %s27
      %p31 = pneg %p25
      %p32 = scmp.eq.s32.totalorder %s16, 1
      %p33 = por %p31, %p32
      %p34 = scmp.ne.s32.totalorder %s26, %s29
      %p35 = scmp.eq.s32.totalorder %s16, 0
      %p36 = por %p34, %p35
      %p37 = scmp.ne.s32.totalorder %s26, %s29
      %p38 = scmp.eq.s32.totalorder %s21, 1
      %p39 = por %p37, %p38
      %p40 = scmp.ne.s32.totalorder %s29, %s30
      %p41 = scmp.eq.s32.totalorder %s21, 0
      %p42 = por %p40, %p41
      %p43 = scmp.ne.s32.totalorder %s29, %s30
      %p44 = scmp.eq.s32.totalorder %s22, 1
      %p45 = por %p43, %p44
      %p47 = scmp.ne.s32.totalorder %s30, %s46
      %p48 = scmp.eq.s32.totalorder %s22, 0
      %p49 = por %p47, %p48
      %s51 = sadd.s32 %s50, 1
      %p54 = scmp.eq.s32.totalorder %s16, 1
      %p55 = scmp.ne.s32.totalorder %s50, %s52
      %p56 = scmp.eq.s32.totalorder %s16, 0
      %p57 = por %p55, %p56
      %p58 = scmp.ne.s32.totalorder %s50, %s52
      %p59 = scmp.eq.s32.totalorder %s21, 1
      %p60 = por %p58, %p59
      %p61 = scmp.ne.s32.totalorder %s52, %s53
      %p62 = scmp.eq.s32.totalorder %s21, 0
      %p63 = por %p61, %p62
      %p64 = scmp.ne.s32.totalorder %s52, %s53
      %p65 = scmp.eq.s32.totalorder %s22, 1
      %p66 = por %p64, %p65
      %p68 = scmp.ne.s32.totalorder %s53, %s67
      %p69 = scmp.eq.s32.totalorder %s22, 0
      %p70 = por %p68, %p69
      %s72 = sadd.s32 %s71, 1
      %p75 = scmp.eq.s32.totalorder %s16, 1
      %p76 = scmp.ne.s32.totalorder %s71, %s73
      %p77 = scmp.eq.s32.totalorder %s16, 0
      %p78 = por %p76, %p77
      %p79 = scmp.ne.s32.totalorder %s71, %s73
      %p80 = scmp.eq.s32.totalorder %s21, 1
      %p81 = por %p79, %p80
      %p82 = scmp.ne.s32.totalorder %s73, %s74
      %p83 = scmp.eq.s32.totalorder %s21, 0
      %p84 = por %p82, %p83
      %p85 = scmp.ne.s32.totalorder %s73, %s74
      %p86 = scmp.eq.s32.totalorder %s22, 1
      %p87 = por %p85, %p86
      %p89 = scmp.ne.s32.totalorder %s74, %s88
      %p90 = scmp.eq.s32.totalorder %s22, 0
      %p91 = por %p89, %p90
      %s93 = sadd.s32 %s92, 1
      %p96 = scmp.eq.s32.totalorder %s16, 1
      %p97 = scmp.ne.s32.totalorder %s92, %s94
      %p98 = scmp.eq.s32.totalorder %s16, 0
      %p99 = por %p97, %p98
      %p100 = scmp.ne.s32.totalorder %s92, %s94
      %p101 = scmp.eq.s32.totalorder %s21, 1
      %p102 = por %p100, %p101
      %p103 = scmp.ne.s32.totalorder %s94, %s95
      %p104 = scmp.eq.s32.totalorder %s21, 0
      %p105 = por %p103, %p104
      %p106 = scmp.ne.s32.totalorder %s94, %s95
      %p107 = scmp.eq.s32.totalorder %s22, 1
      %p108 = por %p106, %p107
      %p110 = scmp.ne.s32.totalorder %s95, %s109
      %p111 = scmp.eq.s32.totalorder %s22, 0
      %p112 = por %p110, %p111
      %s114 = sadd.s32 %s113, 1
      %p117 = scmp.eq.s32.totalorder %s16, 1
      %p118 = scmp.ne.s32.totalorder %s113, %s115
      %p119 = scmp.eq.s32.totalorder %s16, 0
      %p120 = por %p118, %p119
      %p121 = scmp.ne.s32.totalorder %s113, %s115
      %p122 = scmp.eq.s32.totalorder %s21, 1
      %p123 = por %p121, %p122
      %p124 = scmp.ne.s32.totalorder %s115, %s116
      %p125 = scmp.eq.s32.totalorder %s21, 0
      %p126 = por %p124, %p125
      %p127 = scmp.ne.s32.totalorder %s115, %s116
      %p128 = scmp.eq.s32.totalorder %s22, 1
      %p129 = por %p127, %p128
      %p131 = scmp.ne.s32.totalorder %s116, %s130
      %p132 = scmp.eq.s32.totalorder %s22, 0
      %p133 = por %p131, %p132
      %s134 = ssub.s32 %s16, %s23
      %p135 = scmp.eq.s32.totalorder %s134, 0
      %s137 = sadd.s32 %s136, 1
      %s138 = scalar_select %p135, %s136, %s137
      %p141 = pneg %p135
      %p142 = scmp.eq.s32.totalorder %s16, 1
      %p143 = por %p141, %p142
      %p144 = scmp.ne.s32.totalorder %s136, %s139
      %p145 = scmp.eq.s32.totalorder %s16, 0
      %p146 = por %p144, %p145
      %p147 = scmp.ne.s32.totalorder %s136, %s139
      %p148 = scmp.eq.s32.totalorder %s21, 1
      %p149 = por %p147, %p148
      %p150 = scmp.ne.s32.totalorder %s139, %s140
      %p151 = scmp.eq.s32.totalorder %s21, 0
      %p152 = por %p150, %p151
      %p153 = scmp.ne.s32.totalorder %s139, %s140
      %p154 = scmp.eq.s32.totalorder %s22, 1
      %p155 = por %p153, %p154
      %p157 = scmp.ne.s32.totalorder %s140, %s156
      %p158 = scmp.eq.s32.totalorder %s22, 0
      %p159 = por %p157, %p158
      %p160 = scmp.le.s32.totalorder 1, %s16
      %p161 = scmp.lt.s32.totalorder %s16, 3
      %p162 = pnand %p160, %p161
      %p163 = pneg %p162
      // Predicated region
      $region9: #{tpu_custom_call.1} parent=5 // pred_check
        _
      $region10: #{tpu_custom_call.1} parent=5 // pred_check_branch
        %165 = sbr.rel (%p162) target = $region12
      $region11: #{tpu_custom_call.1} parent=5 // pred_region
        %s166 = ssub.s32 %s16, 1
        // Predicated region
        $region13: #{tpu_custom_call.1} parent=11 // pred_check
          %p167 = pneg %p63
        $region14: #{tpu_custom_call.1} parent=11 // pred_check_branch
          %169 = sbr.rel (%p167) target = $region16
        $region15: #{tpu_custom_call.1} parent=11 // pred_region
          %s171 = ssub.s32 1024, 1024
          %172 = vsyncadd [#allocation4], %s171
          %s173 = sshll.u32 [#allocation3], 4
          %s174 = int_to_ptr.vmem [resolvable:$true] %s173
          %179 = dma.hbm_to_vmem [thread:$0]  %s1, 1024, %s174, [#allocation4], 128, 128, 8
        $region16: #{tpu_custom_call.1} parent=11 // pred_fallthru
          _
        // Predicated region
        $region17: #{tpu_custom_call.1} parent=11 // pred_check
          %p180 = pneg %p84
        $region18: #{tpu_custom_call.1} parent=11 // pred_check_branch
          %182 = sbr.rel (%p180) target = $region20
        $region19: #{tpu_custom_call.1} parent=11 // pred_region
          _
        $region20: #{tpu_custom_call.1} parent=11 // pred_fallthru
          _
        // Predicated region
        $region21: #{tpu_custom_call.1} parent=11 // pred_check
          %p183 = pneg %p105
        $region22: #{tpu_custom_call.1} parent=11 // pred_check_branch
          %185 = sbr.rel (%p183) target = $region24
        $region23: #{tpu_custom_call.1} parent=11 // pred_region
          _
        $region24: #{tpu_custom_call.1} parent=11 // pred_fallthru
          _
        // Predicated region
        $region25: #{tpu_custom_call.1} parent=11 // pred_check
          %p186 = pneg %p126
        $region26: #{tpu_custom_call.1} parent=11 // pred_check_branch
          %188 = sbr.rel (%p186) target = $region28
        $region27: #{tpu_custom_call.1} parent=11 // pred_region
          _
        $region28: #{tpu_custom_call.1} parent=11 // pred_fallthru
          _
      $region12: #{tpu_custom_call.1} parent=5 // pred_fallthru
        _
      %p189 = scmp.lt.s32.totalorder %s16, 2
      // Predicated region
      $region29: #{tpu_custom_call.1} parent=5 // pred_check
        %p190 = pneg %p189
      $region30: #{tpu_custom_call.1} parent=5 // pred_check_branch
        %192 = sbr.rel (%p190) target = $region32
      $region31: #{tpu_custom_call.1} parent=5 // pred_region
        // Predicated region
        $region33: #{tpu_custom_call.1} parent=31 // pred_check
          %p193 = pneg %p36
        $region34: #{tpu_custom_call.1} parent=31 // pred_check_branch
          %195 = sbr.rel (%p193) target = $region36
        $region35: #{tpu_custom_call.1} parent=31 // pred_region
          %p196 = scmp.lt.s32.totalorder %s16, 1
          %s197 = scalar_select %p196, %s16, 1
          %s198 = smul.addr %s197, 4
          %s199 = scalar_lea.vmem %s0, %s198
        $region36: #{tpu_custom_call.1} parent=31 // pred_fallthru
          _
      $region32: #{tpu_custom_call.1} parent=5 // pred_fallthru
        _
      %p200 = scmp.le.s32.totalorder 1, %s16
      %p201 = scmp.lt.s32.totalorder %s16, 3
      %p202 = pnand %p200, %p201
      %p203 = pneg %p202
      // Predicated region
      $region37: #{tpu_custom_call.1} parent=5 // pred_check
        _
      $region38: #{tpu_custom_call.1} parent=5 // pred_check_branch
        %205 = sbr.rel (%p202) target = $region40
      $region39: #{tpu_custom_call.1} parent=5 // pred_region
        %s206 = ssub.s32 %s16, 1
        // Predicated region
        $region41: #{tpu_custom_call.1} parent=39 // pred_check
          %p207 = pneg %p63
        $region42: #{tpu_custom_call.1} parent=39 // pred_check_branch
          %209 = sbr.rel (%p207) target = $region44
        $region43: #{tpu_custom_call.1} parent=39 // pred_region
          %210 = dma.done [#allocation4], 1024
        $region44: #{tpu_custom_call.1} parent=39 // pred_fallthru
          _
        %p211 = scmp.lt.s32.totalorder %s21, 1
        %s212 = scalar_select %p211, %s21, 1
        %s213 = smul.addr %s212, 4
        %s214 = scalar_lea.vmem %s0, %s213
        %p215 = pneg %p42
        %p216 = pneg %p39
        %p217 = pneg %p63
        %p218 = pneg %p60
        %p219 = pneg %p84
        %p220 = pneg %p81
        %p221 = pneg %p105
        %p222 = pneg %p102
        %p223 = pneg %p126
        %p224 = pneg %p123
        %p225 = pneg %p152
        %p226 = pneg %p149
        %s227 = sand.u32 %s139, 1
        %s228 = scalar_lea.sflag [#allocation5], %s227
        %s229 = sand.u32 %s139, 1
        %s230 = scalar_lea.vmem [#allocation6], %s229
        %p231 = scmp.lt.s32.totalorder %s21, 1
        %s232 = scalar_select %p231, %s21, 1
        %s233 = smul.addr %s232, 4
        %s234 = scalar_lea.vmem %s0, %s233
        %v235 = vld [vmem:[%s234] sm:$0xf]
        %v236 = vlaneseq
        %v237 = vshrl.u32 %v236, 7
        %v238 = vadd.s32 %v237, 8
        %v239 = vadd.s32 %v237, 16
        %v240 = vadd.s32 %v237, 24
        %v241 = vadd.s32 %v237, 32
        %v242 = vadd.s32 %v237, 40
        %v243 = vadd.s32 %v237, 48
        %v244 = vadd.s32 %v237, 56
        %v245 = vlaneseq
        %v246 = vshrl.u32 %v245, 7
        %v247 = vsub.s32 0, %v246
        %v248 = vrot.slane %v235, %v247
        %vm249 = vcmp.eq.s32.totalorder %v237, %v248
        %vm250 = vcmp.eq.s32.totalorder %v238, %v248
        %vm251 = vcmp.eq.s32.totalorder %v239, %v248
        %vm252 = vcmp.eq.s32.totalorder %v240, %v248
        %vm253 = vcmp.eq.s32.totalorder %v241, %v248
        %vm254 = vcmp.eq.s32.totalorder %v242, %v248
        %vm255 = vcmp.eq.s32.totalorder %v243, %v248
        %vm256 = vcmp.eq.s32.totalorder %v244, %v248
        %v257 = vlaneseq
        %v258 = vshrl.u32 %v257, 7
        %v259 = vsub.s32 1, %v258
        %v260 = vrot.slane %v235, %v259
        %vm261 = vcmp.eq.s32.totalorder %v237, %v260
        %vm262 = vcmp.eq.s32.totalorder %v238, %v260
        %vm263 = vcmp.eq.s32.totalorder %v239, %v260
        %vm264 = vcmp.eq.s32.totalorder %v240, %v260
        %vm265 = vcmp.eq.s32.totalorder %v241, %v260
        %vm266 = vcmp.eq.s32.totalorder %v242, %v260
        %vm267 = vcmp.eq.s32.totalorder %v243, %v260
        %vm268 = vcmp.eq.s32.totalorder %v244, %v260
        %vm269 = vmor %vm249, %vm261
        %vm270 = vmor %vm250, %vm262
        %vm271 = vmor %vm251, %vm263
        %vm272 = vmor %vm252, %vm264
        %vm273 = vmor %vm253, %vm265
        %vm274 = vmor %vm254, %vm266
        %vm275 = vmor %vm255, %vm267
        %vm276 = vmor %vm256, %vm268
        %v277 = vlaneseq
        %v278 = vshrl.u32 %v277, 7
        %v279 = vsub.s32 2, %v278
        %v280 = vrot.slane %v235, %v279
        %vm281 = vcmp.eq.s32.totalorder %v237, %v280
        %vm282 = vcmp.eq.s32.totalorder %v238, %v280
        %vm283 = vcmp.eq.s32.totalorder %v239, %v280
        %vm284 = vcmp.eq.s32.totalorder %v240, %v280
        %vm285 = vcmp.eq.s32.totalorder %v241, %v280
        %vm286 = vcmp.eq.s32.totalorder %v242, %v280
        %vm287 = vcmp.eq.s32.totalorder %v243, %v280
        %vm288 = vcmp.eq.s32.totalorder %v244, %v280
        %vm289 = vmor %vm269, %vm281
        %vm290 = vmor %vm270, %vm282
        %vm291 = vmor %vm271, %vm283
        %vm292 = vmor %vm272, %vm284
        %vm293 = vmor %vm273, %vm285
        %vm294 = vmor %vm274, %vm286
        %vm295 = vmor %vm275, %vm287
        %vm296 = vmor %vm276, %vm288
        %v297 = vlaneseq
        %v298 = vshrl.u32 %v297, 7
        %v299 = vsub.s32 3, %v298
        %v300 = vrot.slane %v235, %v299
        %vm301 = vcmp.eq.s32.totalorder %v237, %v300
        %vm302 = vcmp.eq.s32.totalorder %v238, %v300
        %vm303 = vcmp.eq.s32.totalorder %v239, %v300
        %vm304 = vcmp.eq.s32.totalorder %v240, %v300
        %vm305 = vcmp.eq.s32.totalorder %v241, %v300
        %vm306 = vcmp.eq.s32.totalorder %v242, %v300
        %vm307 = vcmp.eq.s32.totalorder %v243, %v300
        %vm308 = vcmp.eq.s32.totalorder %v244, %v300
        %vm309 = vmor %vm289, %vm301
        %vm310 = vmor %vm290, %vm302
        %vm311 = vmor %vm291, %vm303
        %vm312 = vmor %vm292, %vm304
        %vm313 = vmor %vm293, %vm305
        %vm314 = vmor %vm294, %vm306
        %vm315 = vmor %vm295, %vm307
        %vm316 = vmor %vm296, %vm308
        %v317 = vsel %vm309, 1, 0
        %v318 = vsel %vm310, 1, 0
        %v319 = vsel %vm311, 1, 0
        %v320 = vsel %vm312, 1, 0
        %v321 = vsel %vm313, 1, 0
        %v322 = vsel %vm314, 1, 0
        %v323 = vsel %vm315, 1, 0
        %v324 = vsel %vm316, 1, 0
        %v325 = vcvt.s32.f32 %v317
        %v326 = vcvt.s32.f32 %v318
        %v327 = vcvt.s32.f32 %v319
        %v328 = vcvt.s32.f32 %v320
        %v329 = vcvt.s32.f32 %v321
        %v330 = vcvt.s32.f32 %v322
        %v331 = vcvt.s32.f32 %v323
        %v332 = vcvt.s32.f32 %v324
        %v333 = vld [vmem:[#allocation3] sm:$0xff]
        %v334 = vld [vmem:[#allocation3 + $0x8] sm:$0xff]
        %v335 = vld [vmem:[#allocation3 + $0x10] sm:$0xff]
        %v336 = vld [vmem:[#allocation3 + $0x18] sm:$0xff]
        %v337 = vld [vmem:[#allocation3 + $0x20] sm:$0xff]
        %v338 = vld [vmem:[#allocation3 + $0x28] sm:$0xff]
        %v339 = vld [vmem:[#allocation3 + $0x30] sm:$0xff]
        %v340 = vld [vmem:[#allocation3 + $0x38] sm:$0xff]
        %vm341 = vcmask 523264
        %v343 = vsel %vm341, %v333, 0
        %v346 = vsel %vm341, %v334, 0
        %v349 = vsel %vm341, %v335, 0
        %v352 = vsel %vm341, %v336, 0
        %v355 = vsel %vm341, %v337, 0
        %v358 = vsel %vm341, %v338, 0
        %v361 = vsel %vm341, %v339, 0
        %v364 = vsel %vm341, %v340, 0
        %366 = vmatprep.subr.mxu0 0.0
        %367 = vmatpush1.msra.mxu0 %v325
        %368 = vmatprep.subr.mxu0 0.0
        %369 = vmatpush1.msra.mxu0 %v326
        %370 = vmatprep.subr.mxu0 0.0
        %371 = vmatpush1.msra.mxu0 %v327
        %372 = vmatprep.subr.mxu0 0.0
        %373 = vmatpush1.msra.mxu0 %v328
        %374 = vmatprep.subr.mxu0 0.0
        %375 = vmatpush1.msra.mxu0 %v329
        %376 = vmatprep.subr.mxu0 0.0
        %377 = vmatpush1.msra.mxu0 %v330
        %378 = vmatprep.subr.mxu0 0.0
        %379 = vmatpush1.msra.mxu0 %v331
        %380 = vmatprep.subr.mxu0 0.0
        %381 = vmatpush1.msra.mxu0 %v332
        %382 = vmatprep.subr.mxu0 0.0
        %383 = vmatpush1.msra.mxu0 0.0
        %384 = vmatprep.subr.mxu0 0.0
        %385 = vmatpush1.msra.mxu0 0.0
        %386 = vmatprep.subr.mxu0 0.0
        %387 = vmatpush1.msra.mxu0 0.0
        %388 = vmatprep.subr.mxu0 0.0
        %389 = vmatpush1.msra.mxu0 0.0
        %390 = vmatprep.subr.mxu0 0.0
        %391 = vmatpush1.msra.mxu0 0.0
        %392 = vmatprep.subr.mxu0 0.0
        %393 = vmatpush1.msra.mxu0 0.0
        %394 = vmatprep.subr.mxu0 0.0
        %395 = vmatpush1.msra.mxu0 0.0
        %396 = vmatprep.subr.mxu0 0.0
        %397 = vmatpush1.msra.mxu0 0.0
        %398 = vmatprep.subr.mxu0 0.0
        %399 = vmatpush1.msra.mxu0 0.0
        %400 = vmatprep.subr.mxu0 0.0
        %401 = vmatpush1.msra.mxu0 0.0
        %402 = vmatprep.subr.mxu0 0.0
        %403 = vmatpush1.msra.mxu0 0.0
        %404 = vmatprep.subr.mxu0 0.0
        %405 = vmatpush1.msra.mxu0 0.0
        %406 = vmatprep.subr.mxu0 0.0
        %407 = vmatpush1.msra.mxu0 0.0
        %408 = vmatprep.subr.mxu0 0.0
        %409 = vmatpush1.msra.mxu0 0.0
        %410 = vmatprep.subr.mxu0 0.0
        %411 = vmatpush1.msra.mxu0 0.0
        %412 = vmatprep.subr.mxu0 0.0
        %413 = vmatpush1.msra.mxu0 0.0
        %414 = vmatprep.subr.mxu0 0.0
        %415 = vmatpush1.msra.mxu0 0.0
        %416 = vmatprep.subr.mxu0 0.0
        %417 = vmatpush1.msra.mxu0 0.0
        %418 = vmatprep.subr.mxu0 0.0
        %419 = vmatpush1.msra.mxu0 0.0
        %420 = vmatprep.subr.mxu0 0.0
        %421 = vmatpush1.msra.mxu0 0.0
        %422 = vmatprep.subr.mxu0 0.0
        %423 = vmatpush1.msra.mxu0 0.0
        %424 = vmatprep.subr.mxu0 0.0
        %425 = vmatpush1.msra.mxu0 0.0
        %426 = vmatprep.subr.mxu0 0.0
        %427 = vmatpush1.msra.mxu0 0.0
        %428 = vmatprep.subr.mxu0 0.0
        %429 = vmatpush1.msra.mxu0 0.0
        %430 = vmatprep.mubr.f32.mxu0 0.0
        %431 = vmatmul.mubr.f32.gmra.mrb[0].mxu0 %v343
        %v432 = vpop.f32.mrb[0].mxu0
        %v433 = vadd.f32 0.0, %v432
        %v434 = vpop.f32.mrb[0].mxu0
        %435 = vmatprep.mubr.f32.mxu0 0.0
        %436 = vmatmul.mubr.f32.gmra.mrb[0].mxu0 %v346
        %v437 = vpop.f32.mrb[0].mxu0
        %v438 = vadd.f32 0.0, %v437
        %v439 = vpop.f32.mrb[0].mxu0
        %440 = vmatprep.mubr.f32.mxu0 0.0
        %441 = vmatmul.mubr.f32.gmra.mrb[0].mxu0 %v349
        %v442 = vpop.f32.mrb[0].mxu0
        %v443 = vadd.f32 0.0, %v442
        %v444 = vpop.f32.mrb[0].mxu0
        %445 = vmatprep.mubr.f32.mxu0 0.0
        %446 = vmatmul.mubr.f32.gmra.mrb[0].mxu0 %v352
        %v447 = vpop.f32.mrb[0].mxu0
        %v448 = vadd.f32 0.0, %v447
        %v449 = vpop.f32.mrb[0].mxu0
        %450 = vmatprep.mubr.f32.mxu0 0.0
        %451 = vmatmul.mubr.f32.gmra.mrb[0].mxu0 %v355
        %v452 = vpop.f32.mrb[0].mxu0
        %v453 = vadd.f32 0.0, %v452
        %v454 = vpop.f32.mrb[0].mxu0
        %455 = vmatprep.mubr.f32.mxu0 0.0
        %456 = vmatmul.mubr.f32.gmra.mrb[0].mxu0 %v358
        %v457 = vpop.f32.mrb[0].mxu0
        %v458 = vadd.f32 0.0, %v457
        %v459 = vpop.f32.mrb[0].mxu0
        %460 = vmatprep.mubr.f32.mxu0 0.0
        %461 = vmatmul.mubr.f32.gmra.mrb[0].mxu0 %v361
        %v462 = vpop.f32.mrb[0].mxu0
        %v463 = vadd.f32 0.0, %v462
        %v464 = vpop.f32.mrb[0].mxu0
        %465 = vmatprep.mubr.f32.mxu0 0.0
        %466 = vmatmul.mubr.f32.gmra.mrb[0].mxu0 %v364
        %v467 = vpop.f32.mrb[0].mxu0
        %v468 = vadd.f32 0.0, %v467
        %v469 = vpop.f32.mrb[0].mxu0
        %470 = vdwg.mxu0
        %v471 = vld [vmem:[%s2] sm:$0xff]
        %v472 = vld [vmem:[%s2 + $0x8] sm:$0xff]
        %v473 = vld [vmem:[%s2 + $0x10] sm:$0xff]
        %v474 = vld [vmem:[%s2 + $0x18] sm:$0xff]
        %v475 = vld [vmem:[%s3] sm:$0xff]
        %v476 = vld [vmem:[%s3 + $0x8] sm:$0xff]
        %v477 = vld [vmem:[%s3 + $0x10] sm:$0xff]
        %v478 = vld [vmem:[%s3 + $0x18] sm:$0xff]
        %480 = vset.pattern.permute.xlu0 0
        %481 = vperm.xlu0 %480, %v475
        %v482 = vpop.permute.xlu0 %481
        %485 = vset.pattern.permute.xlu0 0
        %486 = vperm.xlu0 %485, %v476
        %v487 = vpop.permute.xlu0 %486
        %490 = vset.pattern.permute.xlu0 0
        %491 = vperm.xlu0 %490, %v477
        %v492 = vpop.permute.xlu0 %491
        %495 = vset.pattern.permute.xlu0 0
        %496 = vperm.xlu0 %495, %v478
        %v497 = vpop.permute.xlu0 %496
        %v500 = vsel %vm341, %v471, 0
        %v503 = vsel %vm341, %v472, 0
        %v506 = vsel %vm341, %v473, 0
        %v509 = vsel %vm341, %v474, 0
        %511 = vmatprep.subr.mxu0 0.0
        %512 = vmatpush1.msra.mxu0 %v433
        %513 = vmatprep.subr.mxu0 0.0
        %514 = vmatpush1.msra.mxu0 %v438
        %515 = vmatprep.subr.mxu0 0.0
        %516 = vmatpush1.msra.mxu0 %v443
        %517 = vmatprep.subr.mxu0 0.0
        %518 = vmatpush1.msra.mxu0 %v448
        %519 = vmatprep.subr.mxu0 0.0
        %520 = vmatpush1.msra.mxu0 %v453
        %521 = vmatprep.subr.mxu0 0.0
        %522 = vmatpush1.msra.mxu0 %v458
        %523 = vmatprep.subr.mxu0 0.0
        %524 = vmatpush1.msra.mxu0 %v463
        %525 = vmatprep.subr.mxu0 0.0
        %526 = vmatpush1.msra.mxu0 %v468
        %527 = vmatprep.subr.mxu0 0.0
        %528 = vmatpush1.msra.mxu0 0.0
        %529 = vmatprep.subr.mxu0 0.0
        %530 = vmatpush1.msra.mxu0 0.0
        %531 = vmatprep.subr.mxu0 0.0
        %532 = vmatpush1.msra.mxu0 0.0
        %533 = vmatprep.subr.mxu0 0.0
        %534 = vmatpush1.msra.mxu0 0.0
        %535 = vmatprep.subr.mxu0 0.0
        %536 = vmatpush1.msra.mxu0 0.0
        %537 = vmatprep.subr.mxu0 0.0
        %538 = vmatpush1.msra.mxu0 0.0
        %539 = vmatprep.subr.mxu0 0.0
        %540 = vmatpush1.msra.mxu0 0.0
        %541 = vmatprep.subr.mxu0 0.0
        %542 = vmatpush1.msra.mxu0 0.0
        %543 = vmatprep.subr.mxu0 0.0
        %544 = vmatpush1.msra.mxu0 0.0
        %545 = vmatprep.subr.mxu0 0.0
        %546 = vmatpush1.msra.mxu0 0.0
        %547 = vmatprep.subr.mxu0 0.0
        %548 = vmatpush1.msra.mxu0 0.0
        %549 = vmatprep.subr.mxu0 0.0
        %550 = vmatpush1.msra.mxu0 0.0
        %551 = vmatprep.subr.mxu0 0.0
        %552 = vmatpush1.msra.mxu0 0.0
        %553 = vmatprep.subr.mxu0 0.0
        %554 = vmatpush1.msra.mxu0 0.0
        %555 = vmatprep.subr.mxu0 0.0
        %556 = vmatpush1.msra.mxu0 0.0
        %557 = vmatprep.subr.mxu0 0.0
        %558 = vmatpush1.msra.mxu0 0.0
        %559 = vmatprep.subr.mxu0 0.0
        %560 = vmatpush1.msra.mxu0 0.0
        %561 = vmatprep.subr.mxu0 0.0
        %562 = vmatpush1.msra.mxu0 0.0
        %563 = vmatprep.subr.mxu0 0.0
        %564 = vmatpush1.msra.mxu0 0.0
        %565 = vmatprep.subr.mxu0 0.0
        %566 = vmatpush1.msra.mxu0 0.0
        %567 = vmatprep.subr.mxu0 0.0
        %568 = vmatpush1.msra.mxu0 0.0
        %569 = vmatprep.subr.mxu0 0.0
        %570 = vmatpush1.msra.mxu0 0.0
        %571 = vmatprep.subr.mxu0 0.0
        %572 = vmatpush1.msra.mxu0 0.0
        %573 = vmatprep.subr.mxu0 0.0
        %574 = vmatpush1.msra.mxu0 0.0
        %575 = vmatprep.mubr.f32.mxu0 0.0
        %576 = vmatmul.mubr.f32.gmra.mrb[0].mxu0 %v500
        %v577 = vpop.f32.mrb[0].mxu0
        %v578 = vadd.f32 %v482, %v577
        %v579 = vpop.f32.mrb[0].mxu0
        %580 = vmatprep.mubr.f32.mxu0 0.0
        %581 = vmatmul.mubr.f32.gmra.mrb[0].mxu0 %v503
        %v582 = vpop.f32.mrb[0].mxu0
        %v583 = vadd.f32 %v487, %v582
        %v584 = vpop.f32.mrb[0].mxu0
        %585 = vmatprep.mubr.f32.mxu0 0.0
        %586 = vmatmul.mubr.f32.gmra.mrb[0].mxu0 %v506
        %v587 = vpop.f32.mrb[0].mxu0
        %v588 = vadd.f32 %v492, %v587
        %v589 = vpop.f32.mrb[0].mxu0
        %590 = vmatprep.mubr.f32.mxu0 0.0
        %591 = vmatmul.mubr.f32.gmra.mrb[0].mxu0 %v509
        %v592 = vpop.f32.mrb[0].mxu0
        %v593 = vadd.f32 %v497, %v592
        %v594 = vpop.f32.mrb[0].mxu0
        %595 = vdwg.mxu0
        %v596 = vmax.f32 %v578, 0.0
        %v597 = vmax.f32 %v583, 0.0
        %v598 = vmax.f32 %v588, 0.0
        %v599 = vmax.f32 %v593, 0.0
        %600 = vset.pattern.permute.xlu0 1
        %601 = vperm.xlu0 %600, %v475
        %v602 = vpop.permute.xlu0 %601
        %604 = vset.pattern.permute.xlu0 1
        %605 = vperm.xlu0 %604, %v476
        %v606 = vpop.permute.xlu0 %605
        %608 = vset.pattern.permute.xlu0 1
        %609 = vperm.xlu0 %608, %v477
        %v610 = vpop.permute.xlu0 %609
        %612 = vset.pattern.permute.xlu0 1
        %613 = vperm.xlu0 %612, %v478
        %v614 = vpop.permute.xlu0 %613
        %v616 = vmul.f32 %v596, %v602
        %v617 = vmul.f32 %v597, %v606
        %v618 = vmul.f32 %v598, %v610
        %v619 = vmul.f32 %v599, %v614
        %v620 = vadd.f32 %v616, %v617
        %v621 = vadd.f32 %v620, %v618
        %v622 = vadd.f32 %v621, %v619
        %v623 = vrot.slane %v622, 4
        %v624 = vadd.f32 %v622, %v623
        %v625 = vrot.slane %v624, 2
        %v626 = vadd.f32 %v624, %v625
        %v627 = vrot.slane %v626, 1
        %v628 = vadd.f32 %v626, %v627
        %s629 = sld [smem:[#allocation2]]
        %v630 = vstv %s629
        %v631 = vadd.f32 %v628, %v630
        %632 = vst [vmem:[%s230] sm:$0x1] %v631
        %s633 = sand.u32 %s139, 1
        %s634 = scalar_lea.sflag [#allocation5], %s633
        %s635 = sand.u32 %s139, 1
        %s636 = scalar_lea.vmem [#allocation6], %s635
        // Predicated region
        $region45: #{tpu_custom_call.1} parent=39 // pred_check
          %p637 = pneg %p149
        $region46: #{tpu_custom_call.1} parent=39 // pred_check_branch
          %639 = sbr.rel (%p637) target = $region48
        $region47: #{tpu_custom_call.1} parent=39 // pred_region
          %s641 = ssub.s32 16, 16
          %642 = vsyncadd %s634, %s641
          %s643 = smul.addr %s21, 16
          %s644 = scalar_lea.hbm %s5, %s643
          %s646 = sshll.u32 %s636, 4
          %s647 = int_to_ptr.vmem [resolvable:$true] %s646
          %649 = dma.vmem_to_hbm [thread:$0]  %s647, 16, %s644, %s634
        $region48: #{tpu_custom_call.1} parent=39 // pred_fallthru
          _
      $region40: #{tpu_custom_call.1} parent=5 // pred_fallthru
        _
      %p650 = scmp.le.s32.totalorder 2, %s16
      // Predicated region
      $region49: #{tpu_custom_call.1} parent=5 // pred_check
        %p651 = pneg %p650
      $region50: #{tpu_custom_call.1} parent=5 // pred_check_branch
        %653 = sbr.rel (%p651) target = $region52
      $region51: #{tpu_custom_call.1} parent=5 // pred_region
        %s654 = ssub.s32 %s16, 2
        // Predicated region
        $region53: #{tpu_custom_call.1} parent=51 // pred_check
          %p655 = pneg %p155
        $region54: #{tpu_custom_call.1} parent=51 // pred_check_branch
          %657 = sbr.rel (%p655) target = $region56
        $region55: #{tpu_custom_call.1} parent=51 // pred_region
          %s658 = sand.u32 %s140, 1
          %s659 = scalar_lea.sflag [#allocation5], %s658
          %s660 = sand.u32 %s140, 1
          %s661 = scalar_lea.vmem [#allocation6], %s660
          %662 = dma.done %s659, 16
        $region56: #{tpu_custom_call.1} parent=51 // pred_fallthru
          _
      $region52: #{tpu_custom_call.1} parent=5 // pred_fallthru
        _
    $region6: #{tpu_custom_call.1} parent=1 // loop_footer
      %s20 = sadd.s32 1, %s16
    $region7: #{tpu_custom_call.1} parent=1 // loop_footer_branch
      %15 = sbr.rel target = $region3
    $region8: #{tpu_custom_call.1} parent=1 // loop_exit
      _
    %663 = vsyncpa [#allocation4], 1
    %s664 = scalar_lea.sflag [#allocation4], 1
    %665 = vsyncpa %s664, 1
    %666 = vsyncpa [#allocation5], 1
    %s667 = scalar_lea.sflag [#allocation5], 1
    %668 = vsyncpa %s667, 1

</llo_original>
